<compile_context>
chip_gen: v5e
topology: v5e:2x2
jax: 0.10.0
libtpu: 0.0.40
codegen_flags: <defaults>
</compile_context>

<pallas_src>
import math

import jax
import jax.numpy as jnp
from jax.experimental import pallas as pl
from jax.experimental.pallas import tpu as pltpu

_LANE = 128


def _round_up(x, m):
    return -(-x // m) * m


def _vmem_bytes():
    """Physical VMEM per core; conservative (v7x = 64 MiB) fallback."""
    try:
        info = pltpu.get_tpu_info()
        return int(getattr(info, "vmem_capacity_bytes", 64 << 20))
    except Exception:
        return 64 << 20


def _pick_tile(dim, cap, align=_LANE):
    """Return (tile, padded): tile is a multiple of `align`, <= max(cap, align);
    padded is a multiple of tile.  Minimizes #blocks, then padding overhead."""
    cap = max(align, (cap // align) * align)
    padded0 = _round_up(max(dim, 1), align)
    if padded0 <= cap:
        return padded0, padded0
    best_key, best = None, None
    t = cap
    while t >= align:
        padded = _round_up(padded0, t)
        key = (padded // t, padded - padded0, -t)
        if best_key is None or key < best_key:
            best_key, best = key, (t, padded)
        t -= align
    return best


def _pad2d(a, rows, cols):
    r, c = a.shape
    if r == rows and c == cols:
        return a
    return jnp.pad(a, ((0, rows - r), (0, cols - c)))


# ---------------------------------------------------------------------------
# Kernels
# ---------------------------------------------------------------------------
def _xw_kernel(x_ref, w_ref, o_ref):
    # GEMM 1: weight fully VMEM-resident; x tile cast to bf16 in-kernel
    # (no wrapper-side bf16 copy of x in HBM).  Single dot + store per tile.
    o_ref[...] = jnp.dot(x_ref[...].astype(jnp.bfloat16), w_ref[...],
                         preferred_element_type=jnp.float32).astype(o_ref.dtype)


def _matmul_bias_kernel(a_ref, b_ref, bias_ref, o_ref):
    # out = A @ B + bias.  f32 accumulation directly into o_ref, which is
    # VMEM-resident across the kk axis (its block index ignores kk).
    kk = pl.program_id(2)

    @pl.when(kk == 0)
    def _init():
        o_ref[...] = jnp.zeros_like(o_ref)

    o_ref[...] += jnp.dot(a_ref[...].astype(jnp.bfloat16),
                          b_ref[...].astype(jnp.bfloat16),
                          preferred_element_type=jnp.float32)

    @pl.when(kk == pl.num_programs(2) - 1)
    def _finalize():
        # Bias added exactly once, at the last K step.
        o_ref[...] += bias_ref[...]


def _tiled_matmul_padded(a_p, b_p, bias_p, *, tm, tn, tk, vmem_limit):
    """out = a_p @ b_p + bias_p on pre-padded operands; f32 output, padded."""
    m_pad, k_pad = a_p.shape
    k_pad2, n_pad = b_p.shape
    assert k_pad == k_pad2 and m_pad % tm == 0 and n_pad % tn == 0 and k_pad % tk == 0

    grid = (m_pad // tm, n_pad // tn, k_pad // tk)
    cost = pl.CostEstimate(
        flops=2 * m_pad * n_pad * k_pad,
        transcendentals=0,
        bytes_accessed=(a_p.size * a_p.dtype.itemsize * grid[1]
                        + b_p.size * b_p.dtype.itemsize * grid[0]
                        + bias_p.size * 4 + m_pad * n_pad * 4))

    return pl.pallas_call(
        _matmul_bias_kernel,
        out_shape=jax.ShapeDtypeStruct((m_pad, n_pad), jnp.float32),
        grid=grid,
        in_specs=[
            pl.BlockSpec((tm, tk), lambda i, j, kk: (i, kk)),
            pl.BlockSpec((tk, tn), lambda i, j, kk: (kk, j)),
            pl.BlockSpec((1, tn), lambda i, j, kk: (0, j)),
        ],
        out_specs=pl.BlockSpec((tm, tn), lambda i, j, kk: (i, j)),
        compiler_params=pltpu.CompilerParams(
            dimension_semantics=("parallel", "parallel", "arbitrary"),
            vmem_limit_bytes=vmem_limit),
        cost_estimate=cost,
    )(a_p, b_p, bias_p)


# ---------------------------------------------------------------------------
# GraphConvolution forward
# ---------------------------------------------------------------------------
def graph_convolution(x, adj, weight, bias=None):
    """GraphConvolution.forward: out = adj @ (x @ weight) (+ bias)."""
    # TODO(synk): th.spmm's sparse-storage fast path has no dense-Pallas
    # equivalent here; adj is consumed as a dense matrix (block-sparse
    # skipping would need PrefetchScalarGridSpec with nonzero-block indices).
    n_nodes, in_f = x.shape
    in_f2, out_f = weight.shape
    assert in_f == in_f2 and adj.shape == (n_nodes, n_nodes)

    phys_vmem = _vmem_bytes()
    vmem_limit = max(32 << 20, min(phys_vmem - (8 << 20), 112 << 20))
    budget = int(vmem_limit * 0.75)          # double-buffered working-set cap

    out_pad_full = _round_up(out_f, _LANE)

    # ---- GEMM 2 tile plan (adj @ support): full-N output tile preferred ----
    def _g2_bytes(tnode_, tn_):
        return (2 * tnode_ * tnode_ * 4      # adj f32 blocks (double-buffered)
                + tnode_ * tnode_ * 2        # in-kernel bf16 copy of adj tile
                + 2 * tnode_ * tn_ * 2       # support bf16 blocks
                + 2 * tnode_ * tn_ * 4       # f32 output block (+ headroom)
                + tn_ * 4)                   # bias row

    tn = out_pad = out_pad_full
    tnode = nodes_pad = None
    for cap in (1024, 512, 384, 256, 128):
        t, npad = _pick_tile(n_nodes, cap)
        if _g2_bytes(t, out_pad_full) <= budget:
            tnode, nodes_pad = t, npad
            break
    if tnode is None:
        # Very wide out_features: also split the GEMM-2 N axis.
        tnode, nodes_pad = _pick_tile(n_nodes, 128)
        for cap_n in (2048, 1024, 512, 256, 128):
            tn, out_pad = _pick_tile(out_f, cap_n)
            if _g2_bytes(tnode, tn) <= budget:
                break

    # ---- GEMM 1: support = x @ W (weight VMEM-resident when it fits) ------
    in_pad = _round_up(in_f, _LANE)
    g1_resident_bytes = (2 * tnode * in_pad * 4    # x f32 blocks (dbl-buffered)
                         + tnode * in_pad * 2      # in-kernel bf16 copy of x
                         + in_pad * out_pad * 2    # resident bf16 weight
                         + 2 * tnode * out_pad * 2  # bf16 support output blocks
                         + tnode * out_pad * 4)    # f32 dot result before cast

    if g1_resident_bytes <= budget:
        x_p = _pad2d(x.astype(jnp.float32), nodes_pad, in_pad)
        w_p = _pad2d(weight.astype(jnp.bfloat16), in_pad, out_pad)
        support_p = pl.pallas_call(
            _xw_kernel,
            out_shape=jax.ShapeDtypeStruct((nodes_pad, out_pad), jnp.bfloat16),
            grid=(nodes_pad // tnode,),
            in_specs=[
                pl.BlockSpec((tnode, in_pad), lambda i: (i, 0)),
                pl.BlockSpec((in_pad, out_pad), lambda i: (0, 0)),
            ],
            out_specs=pl.BlockSpec((tnode, out_pad), lambda i: (i, 0)),
            compiler_params=pltpu.CompilerParams(
                dimension_semantics=("parallel",),
                vmem_limit_bytes=vmem_limit),
            cost_estimate=pl.CostEstimate(
                flops=2 * nodes_pad * in_pad * out_pad,
                transcendentals=0,
                bytes_accessed=(nodes_pad * in_pad * 4 + in_pad * out_pad * 2
                                + nodes_pad * out_pad * 2)),
        )(x_p, w_p)
    else:
        # Weight too large to hold resident: general tiled kernel (f32 out).
        tk1, in_pad = _pick_tile(in_f, 512)
        x_p = _pad2d(x.astype(jnp.float32), nodes_pad, in_pad)
        w_p = _pad2d(weight.astype(jnp.float32), in_pad, out_pad)
        support_p = _tiled_matmul_padded(
            x_p, w_p, jnp.zeros((1, out_pad), jnp.float32),
            tm=tnode, tn=tn, tk=tk1, vmem_limit=vmem_limit)

    # ---- GEMM 2: out = adj @ support + bias (support kept padded) ---------
    adj_p = _pad2d(adj.astype(jnp.float32), nodes_pad, nodes_pad)
    if bias is None:
        bias_p = jnp.zeros((1, out_pad), jnp.float32)
    else:
        bias_p = _pad2d(bias.astype(jnp.float32).reshape(1, -1), 1, out_pad)

    out_p = _tiled_matmul_padded(adj_p, support_p, bias_p,
                                 tm=tnode, tn=tn, tk=tnode,
                                 vmem_limit=vmem_limit)
    return out_p[:n_nodes, :out_f]


def init_graph_convolution_params(key, in_features, out_features):
    """Matches GraphConvolution.reset_parameters: uniform(-stdv, stdv),
    stdv = 1/sqrt(out_features)."""
    kw, kb = jax.random.split(key)
    stdv = 1.0 / math.sqrt(out_features)
    weight = jax.random.uniform(kw, (in_features, out_features), jnp.float32,
                                -stdv, stdv)
    bias = jax.random.uniform(kb, (out_features,), jnp.float32, -stdv, stdv)
    return weight, bias


if __name__ == "__main__":
    key = jax.random.PRNGKey(0)
    kx, kadj, kparams = jax.random.split(key, 3)

    # Small synthetic graph: N nodes, in_features -> out_features.
    n_nodes, in_features, out_features = 16, 32, 64

    x = jax.random.normal(kx, (n_nodes, in_features), jnp.float32)

    # Symmetric row-normalized adjacency with self-loops (dense).
    a = (jax.random.uniform(kadj, (n_nodes, n_nodes)) > 0.7).astype(jnp.float32)
    a = jnp.maximum(a, a.T) + jnp.eye(n_nodes, dtype=jnp.float32)
    adj = a / jnp.sum(a, axis=1, keepdims=True)

    weight, bias = init_graph_convolution_params(kparams, in_features,
                                                 out_features)

    out = graph_convolution(x, adj, weight, bias)
    out_nobias = graph_convolution(x, adj, weight, None)
    jax.block_until_ready((out, out_nobias))

    # Pure-JAX f32 reference (th.spmm on dense == matmul).
    ref = adj @ (x @ weight) + bias
    ref_nb = adj @ (x @ weight)
    assert out.shape == (n_nodes, out_features)
    # bf16 MXU feeds / f32 accumulation => bf16-level tolerance vs f32 ref.
    err = float(jnp.max(jnp.abs(out - ref)))
    assert jnp.allclose(out, ref, atol=2e-2, rtol=2e-2), err
    assert jnp.allclose(out_nobias, ref_nb, atol=2e-2, rtol=2e-2)

    print("KERNEL_OK")
</pallas_src>

<mosaic_0001>
module attributes {stable_mosaic.version = 11 : i64} {
  func.func @_xw_kernel(%arg0: i32, %arg1: memref<128x128xf32, #tpu.memory_space<vmem>>, %arg2: memref<128x128xbf16, #tpu.memory_space<vmem>>, %arg3: memref<128x128xbf16, #tpu.memory_space<vmem>>) attributes {dimension_semantics = [#tpu.dimension_semantics<parallel>], iteration_bounds = array<i64: 1>, scalar_prefetch = 0 : i64, scratch_operands = 0 : i64, tpu.core_type = #tpu.core_type<tc>, window_params = [{transform_indices = @transform_0, window_bounds = array<i64: 128, 128>}, {pipeline_mode = #tpu.pipeline_mode<synchronous>, transform_indices = @transform_1, window_bounds = array<i64: 128, 128>}, {transform_indices = @transform_2, window_bounds = array<i64: 128, 128>}]} {
    %c0 = arith.constant 0 : index
    %c0_0 = arith.constant 0 : index
    %0 = vector.load %arg1[%c0, %c0_0] : memref<128x128xf32, #tpu.memory_space<vmem>>, vector<128x128xf32>
    %1 = arith.truncf %0 : vector<128x128xf32> to vector<128x128xbf16>
    %c0_1 = arith.constant 0 : index
    %c0_2 = arith.constant 0 : index
    %2 = vector.load %arg2[%c0_1, %c0_2] : memref<128x128xbf16, #tpu.memory_space<vmem>>, vector<128x128xbf16>
    %cst = arith.constant dense<0.000000e+00> : vector<128x128xf32>
    %3 = tpu.matmul %1, %2, %cst {dimension_numbers = #tpu.dot_dimension_numbers<[1], [0], [0], [1], [0, 0, 1, 1], [], []>} : vector<128x128xbf16>, vector<128x128xbf16>, vector<128x128xf32> -> vector<128x128xf32>
    %4 = arith.truncf %3 : vector<128x128xf32> to vector<128x128xbf16>
    %c0_3 = arith.constant 0 : index
    %c0_4 = arith.constant 0 : index
    %5 = vector.load %arg3[%c0_3, %c0_4] : memref<128x128xbf16, #tpu.memory_space<vmem>>, vector<128x128xbf16>
    tpu.vector_store %arg3[%c0_3, %c0_4], %4 {strides = array<i32>} : memref<128x128xbf16, #tpu.memory_space<vmem>>, vector<128x128xbf16>,
    return
  }
  func.func @transform_0(%arg0: i32) -> (i32, i32) {
    %c0_i32 = arith.constant 0 : i32
    %c0_i32_0 = arith.constant 0 : i32
    return %arg0, %c0_i32 : i32, i32
  }
  func.func @transform_1(%arg0: i32) -> (i32, i32) {
    %c0_i32 = arith.constant 0 : i32
    %c0_i32_0 = arith.constant 0 : i32
    %c0_i32_1 = arith.constant 0 : i32
    return %c0_i32, %c0_i32_0 : i32, i32
  }
  func.func @transform_2(%arg0: i32) -> (i32, i32) {
    %c0_i32 = arith.constant 0 : i32
    %c0_i32_0 = arith.constant 0 : i32
    return %arg0, %c0_i32 : i32, i32
  }
}

</mosaic_0001>

<llo_original>
// kernel: tpu_custom_call.1
$region0: #{tpu_custom_call.1}
  #allocation0 [shape = 'u32[]', space=smem, size = 0x4, offset = 0x4, fixed_abs, tag = 'smem constant byte address 0x4 - core index']
  #allocation1 [shape = 'u32[72,128]{1,0:T(1,128)}', space=vmem, size = 0x9000, scoped, tag = 'internal scratch']
  %s0 = inlined_call_operand.hbm [shape: f32[128,128], index: 0, kind: input, shape index: {}]
  %s1 = inlined_call_operand.hbm [shape: bf16[128,128], index: 1, kind: input, shape index: {}]
  %s2 = inlined_call_operand.hbm [shape: bf16[128,128], index: 2, kind: output, shape index: {}]
  %s3 = sld [smem:[#allocation0]]
  $region26: #{tpu_custom_call.1} parent=0
    _
  %s5 = ssub.s32 1, %s3
  %s6 = scalar_select 0, %s5, %s3
  $region1: #{tpu_custom_call.1} parent=0
    #allocation2 [shape = 'u8[65536]{0}', space=vmem, size = 0x10000, scoped, tag = 'input window, operand 0, single buffered']
    #allocation3 [shape = 's32[1]{0}', space=sflag, size = 0x4, scoped, tag = 'scoped memory for tpu_custom_call.1']
    #allocation4 [shape = 's32[1]{0}', space=sflag, size = 0x4, scoped, tag = 'scoped memory for tpu_custom_call.1']
    #allocation5 [shape = 'u8[32768]{0}', space=vmem, size = 0x8000, scoped, tag = 'input window, operand 1, single buffered']
    #allocation6 [shape = 's32[1]{0}', space=sflag, size = 0x4, scoped, tag = 'scoped memory for tpu_custom_call.1']
    #allocation7 [shape = 'u8[32768]{0}', space=vmem, size = 0x8000, scoped, tag = 'output window, operand 0, single buffered']
    %7 = vsyncpa [#allocation3], 0
    %8 = vsyncpa [#allocation6], 0
    %9 = vsyncpa [#allocation4], 0
    // Predicated region
    $region2: #{tpu_custom_call.1} parent=1 // pred_check
      _
    $region3: #{tpu_custom_call.1} parent=1 // pred_check_branch
      %11 = sbr.rel (0) target = $region5
    $region4: #{tpu_custom_call.1} parent=1 // pred_region
      %13 = vsyncadd [#allocation3], 0
      %s14 = sshll.u32 %s0, 4
      %s15 = int_to_ptr.hbm [resolvable:$true] %s14
      %s16 = sshll.u32 [#allocation2], 4
      %s17 = int_to_ptr.vmem [resolvable:$true] %s16
      %22 = dma.hbm_to_vmem [thread:$0]  %s15, 2048, %s17, [#allocation3], 128, 128, 8
    $region5: #{tpu_custom_call.1} parent=1 // pred_fallthru
      _
    // Predicated region
    $region6: #{tpu_custom_call.1} parent=1 // pred_check
      _
    $region7: #{tpu_custom_call.1} parent=1 // pred_check_branch
      %24 = sbr.rel (0) target = $region9
    $region8: #{tpu_custom_call.1} parent=1 // pred_region
      %26 = vsyncadd [#allocation6], 0
      %s27 = sshll.u32 %s1, 4
      %s28 = int_to_ptr.hbm [resolvable:$true] %s27
      %s29 = sshll.u32 [#allocation5], 4
      %s30 = int_to_ptr.vmem [resolvable:$true] %s29
      %35 = dma.hbm_to_vmem [thread:$0]  %s28, 1024, %s30, [#allocation6], 64, 64, 4
    $region9: #{tpu_custom_call.1} parent=1 // pred_fallthru
      _
    // Predicated region
    $region10: #{tpu_custom_call.1} parent=1 // pred_check
      _
    $region11: #{tpu_custom_call.1} parent=1 // pred_check_branch
      %37 = sbr.rel (0) target = $region13
    $region12: #{tpu_custom_call.1} parent=1 // pred_region
      %39 = dma.done [#allocation3], 2048
    $region13: #{tpu_custom_call.1} parent=1 // pred_fallthru
      _
    // Predicated region
    $region14: #{tpu_custom_call.1} parent=1 // pred_check
      _
    $region15: #{tpu_custom_call.1} parent=1 // pred_check_branch
      %41 = sbr.rel (0) target = $region17
    $region16: #{tpu_custom_call.1} parent=1 // pred_region
      %43 = dma.done [#allocation6], 1024
    $region17: #{tpu_custom_call.1} parent=1 // pred_fallthru
      _
    %v44 = vld [vmem:[#allocation2] sm:$0xff]
    %v45 = vld [vmem:[#allocation2 + $0x8] sm:$0xff]
    %v46 = vld [vmem:[#allocation2 + $0x10] sm:$0xff]
    %v47 = vld [vmem:[#allocation2 + $0x18] sm:$0xff]
    %v48 = vld [vmem:[#allocation2 + $0x20] sm:$0xff]
    %v49 = vld [vmem:[#allocation2 + $0x28] sm:$0xff]
    %v50 = vld [vmem:[#allocation2 + $0x30] sm:$0xff]
    %v51 = vld [vmem:[#allocation2 + $0x38] sm:$0xff]
    %v52 = vld [vmem:[#allocation2 + $0x40] sm:$0xff]
    %v53 = vld [vmem:[#allocation2 + $0x48] sm:$0xff]
    %v54 = vld [vmem:[#allocation2 + $0x50] sm:$0xff]
    %v55 = vld [vmem:[#allocation2 + $0x58] sm:$0xff]
    %v56 = vld [vmem:[#allocation2 + $0x60] sm:$0xff]
    %v57 = vld [vmem:[#allocation2 + $0x68] sm:$0xff]
    %v58 = vld [vmem:[#allocation2 + $0x70] sm:$0xff]
    %v59 = vld [vmem:[#allocation2 + $0x78] sm:$0xff]
    %v60 = vpack.c.bf16 %v45, %v44
    %v61 = vpack.c.bf16 %v47, %v46
    %v62 = vpack.c.bf16 %v49, %v48
    %v63 = vpack.c.bf16 %v51, %v50
    %v64 = vpack.c.bf16 %v53, %v52
    %v65 = vpack.c.bf16 %v55, %v54
    %v66 = vpack.c.bf16 %v57, %v56
    %v67 = vpack.c.bf16 %v59, %v58
    %v68 = vld [vmem:[#allocation5] sm:$0xf]
    %v69 = vld [vmem:[#allocation5 + $0x4] sm:$0xf]
    %v70 = vld [vmem:[#allocation5 + $0x8] sm:$0xf]
    %v71 = vld [vmem:[#allocation5 + $0xc] sm:$0xf]
    %v72 = vld [vmem:[#allocation5 + $0x10] sm:$0xf]
    %v73 = vld [vmem:[#allocation5 + $0x14] sm:$0xf]
    %v74 = vld [vmem:[#allocation5 + $0x18] sm:$0xf]
    %v75 = vld [vmem:[#allocation5 + $0x1c] sm:$0xf]
    %v76 = vld [vmem:[#allocation5 + $0x20] sm:$0xf]
    %v77 = vld [vmem:[#allocation5 + $0x24] sm:$0xf]
    %v78 = vld [vmem:[#allocation5 + $0x28] sm:$0xf]
    %v79 = vld [vmem:[#allocation5 + $0x2c] sm:$0xf]
    %v80 = vld [vmem:[#allocation5 + $0x30] sm:$0xf]
    %v81 = vld [vmem:[#allocation5 + $0x34] sm:$0xf]
    %v82 = vld [vmem:[#allocation5 + $0x38] sm:$0xf]
    %v83 = vld [vmem:[#allocation5 + $0x3c] sm:$0xf]
    %v100 = vunpack.c.l.b16 %v68
    %v101 = vunpack.c.l.b16 %v69
    %v102 = vunpack.c.l.b16 %v70
    %v103 = vunpack.c.l.b16 %v71
    %v104 = vunpack.c.l.b16 %v72
    %v105 = vunpack.c.l.b16 %v73
    %v106 = vunpack.c.l.b16 %v74
    %v107 = vunpack.c.l.b16 %v75
    %v108 = vunpack.c.l.b16 %v76
    %v109 = vunpack.c.l.b16 %v77
    %v110 = vunpack.c.l.b16 %v78
    %v111 = vunpack.c.l.b16 %v79
    %v112 = vunpack.c.l.b16 %v80
    %v113 = vunpack.c.l.b16 %v81
    %v114 = vunpack.c.l.b16 %v82
    %v115 = vunpack.c.l.b16 %v83
    %v116 = vpack.c.b16 %v101, %v100
    %v117 = vpack.c.b16 %v103, %v102
    %v118 = vpack.c.b16 %v105, %v104
    %v119 = vpack.c.b16 %v107, %v106
    %v120 = vpack.c.b16 %v109, %v108
    %v121 = vpack.c.b16 %v111, %v110
    %v122 = vpack.c.b16 %v113, %v112
    %v123 = vpack.c.b16 %v115, %v114
    %132 = vmatpush.bf16.msra.mxu0 %v123
    %133 = vmatpush.bf16.msra.mxu0 %v122
    %134 = vmatpush.bf16.msra.mxu0 %v121
    %135 = vmatpush.bf16.msra.mxu0 %v120
    %136 = vmatpush.bf16.msra.mxu0 %v119
    %137 = vmatpush.bf16.msra.mxu0 %v118
    %138 = vmatpush.bf16.msra.mxu0 %v117
    %139 = vmatpush.bf16.msra.mxu0 %v116
    %140 = vmatmul.bf16.gmra.mxu0 %v60
    %v141 = vpop.f32.mrf.mxu0
    %v142 = vadd.f32 0.0, %v141
    %v143 = vpop.f32.mrf.mxu0
    %v144 = vadd.f32 0.0, %v143
    %145 = vmatmul.bf16.gmra.mxu0 %v61
    %v146 = vpop.f32.mrf.mxu0
    %v147 = vadd.f32 0.0, %v146
    %v148 = vpop.f32.mrf.mxu0
    %v149 = vadd.f32 0.0, %v148
    %150 = vmatmul.bf16.gmra.mxu0 %v62
    %v151 = vpop.f32.mrf.mxu0
    %v152 = vadd.f32 0.0, %v151
    %v153 = vpop.f32.mrf.mxu0
    %v154 = vadd.f32 0.0, %v153
    %155 = vmatmul.bf16.gmra.mxu0 %v63
    %v156 = vpop.f32.mrf.mxu0
    %v157 = vadd.f32 0.0, %v156
    %v158 = vpop.f32.mrf.mxu0
    %v159 = vadd.f32 0.0, %v158
    %160 = vmatmul.bf16.gmra.mxu0 %v64
    %v161 = vpop.f32.mrf.mxu0
    %v162 = vadd.f32 0.0, %v161
    %v163 = vpop.f32.mrf.mxu0
    %v164 = vadd.f32 0.0, %v163
    %165 = vmatmul.bf16.gmra.mxu0 %v65
    %v166 = vpop.f32.mrf.mxu0
    %v167 = vadd.f32 0.0, %v166
    %v168 = vpop.f32.mrf.mxu0
    %v169 = vadd.f32 0.0, %v168
    %170 = vmatmul.bf16.gmra.mxu0 %v66
    %v171 = vpop.f32.mrf.mxu0
    %v172 = vadd.f32 0.0, %v171
    %v173 = vpop.f32.mrf.mxu0
    %v174 = vadd.f32 0.0, %v173
    %175 = vmatmul.bf16.gmra.mxu0 %v67
    %v176 = vpop.f32.mrf.mxu0
    %v177 = vadd.f32 0.0, %v176
    %v178 = vpop.f32.mrf.mxu0
    %v179 = vadd.f32 0.0, %v178
    %180 = vdwg.mxu0
    %v181 = vpack.c.bf16 %v142, %v142
    %v182 = vpack.c.bf16 %v144, %v144
    %v183 = vpack.c.bf16 %v147, %v147
    %v184 = vpack.c.bf16 %v149, %v149
    %v185 = vpack.c.bf16 %v152, %v152
    %v186 = vpack.c.bf16 %v154, %v154
    %v187 = vpack.c.bf16 %v157, %v157
    %v188 = vpack.c.bf16 %v159, %v159
    %v189 = vpack.c.bf16 %v162, %v162
    %v190 = vpack.c.bf16 %v164, %v164
    %v191 = vpack.c.bf16 %v167, %v167
    %v192 = vpack.c.bf16 %v169, %v169
    %v193 = vpack.c.bf16 %v172, %v172
    %v194 = vpack.c.bf16 %v174, %v174
    %v195 = vpack.c.bf16 %v177, %v177
    %v196 = vpack.c.bf16 %v179, %v179
    %197 = vst [vmem:[#allocation7] sm:$0xf] %v181
    %198 = vst [vmem:[#allocation7 + $0x4] sm:$0xf] %v182
    %199 = vst [vmem:[#allocation7 + $0x8] sm:$0xf] %v183
    %200 = vst [vmem:[#allocation7 + $0xc] sm:$0xf] %v184
    %201 = vst [vmem:[#allocation7 + $0x10] sm:$0xf] %v185
    %202 = vst [vmem:[#allocation7 + $0x14] sm:$0xf] %v186
    %203 = vst [vmem:[#allocation7 + $0x18] sm:$0xf] %v187
    %204 = vst [vmem:[#allocation7 + $0x1c] sm:$0xf] %v188
    %205 = vst [vmem:[#allocation7 + $0x20] sm:$0xf] %v189
    %206 = vst [vmem:[#allocation7 + $0x24] sm:$0xf] %v190
    %207 = vst [vmem:[#allocation7 + $0x28] sm:$0xf] %v191
    %208 = vst [vmem:[#allocation7 + $0x2c] sm:$0xf] %v192
    %209 = vst [vmem:[#allocation7 + $0x30] sm:$0xf] %v193
    %210 = vst [vmem:[#allocation7 + $0x34] sm:$0xf] %v194
    %211 = vst [vmem:[#allocation7 + $0x38] sm:$0xf] %v195
    %212 = vst [vmem:[#allocation7 + $0x3c] sm:$0xf] %v196
    // Predicated region
    $region18: #{tpu_custom_call.1} parent=1 // pred_check
      _
    $region19: #{tpu_custom_call.1} parent=1 // pred_check_branch
      %214 = sbr.rel (0) target = $region21
    $region20: #{tpu_custom_call.1} parent=1 // pred_region
      %216 = vsyncadd [#allocation4], 0
      %s217 = sshll.u32 [#allocation7], 4
      %s218 = int_to_ptr.vmem [resolvable:$true] %s217
      %s219 = sshll.u32 %s2, 4
      %s220 = int_to_ptr.hbm [resolvable:$true] %s219
      %225 = dma.vmem_to_hbm [thread:$0]  %s218, 1024, %s220, [#allocation4], 64, 64, 4
    $region21: #{tpu_custom_call.1} parent=1 // pred_fallthru
      _
    // Predicated region
    $region22: #{tpu_custom_call.1} parent=1 // pred_check
      _
    $region23: #{tpu_custom_call.1} parent=1 // pred_check_branch
      %227 = sbr.rel (0) target = $region25
    $region24: #{tpu_custom_call.1} parent=1 // pred_region
      %229 = dma.done [#allocation4], 1024
    $region25: #{tpu_custom_call.1} parent=1 // pred_fallthru
      _
    %230 = vsyncpa [#allocation3], 1
    %231 = vsyncpa [#allocation6], 1
    %232 = vsyncpa [#allocation4], 1

</llo_original>
